<compile_context>
chip_gen: v6e
topology: v6e:2x2x1
jax: 0.10.0
libtpu: 0.0.40
codegen_flags: <defaults>
</compile_context>

<pallas_src>
import jax
import jax.numpy as jnp
from jax import lax
from jax.experimental import pallas as pl
from jax.experimental.pallas import tpu as pltpu
import numpy as np


def _row_l2_as_lane_row(d):
    """sqrt(sum(d**2, axis=1)) for a (TB, D) tile, returned lane-major as (1, TB).

    The row reduction is expressed as a (1, D) x (TB, D) contraction (contract on the
    last dims) so the result lands lane-major on the MXU — this keeps the output block
    lane-dense without an explicit (TB, 1) -> (1, TB) relayout.  precision=HIGHEST keeps
    the f32 accumulation accurate enough to match the VPU reference to <1e-6.
    """
    dd = d * d
    ones_row = jnp.ones((1, dd.shape[1]), dtype=jnp.float32)
    dist_sq = lax.dot_general(
        ones_row, dd,
        dimension_numbers=(((1,), (1,)), ((), ())),
        preferred_element_type=jnp.float32,
        precision=lax.Precision.HIGHEST)          # (1, TB)
    return jnp.sqrt(dist_sq)


def _transe_kernel(h_ref, r_ref, t_ref, o_ref):
    """||normalize(h) + normalize(r) - normalize(t)||_2 per row.

    h_ref, r_ref, t_ref : (TB, D) float32 VMEM tiles
    o_ref               : (1, TB) float32 VMEM tile (lane-dense distances)
    """
    # torch.F.normalize clamps the norm at eps=1e-12; clamping sumsq at eps^2 is identical.
    eps_sq = jnp.float32(1e-24)

    def _l2_normalize(x):
        sumsq = jnp.sum(x * x, axis=1, keepdims=True)          # (TB, 1)
        return x * lax.rsqrt(jnp.maximum(sumsq, eps_sq))       # rsqrt -> EUP slot

    h = _l2_normalize(h_ref[...])
    r = _l2_normalize(r_ref[...])
    t = _l2_normalize(t_ref[...])
    o_ref[...] = _row_l2_as_lane_row(h + r - t)


def _transe_kernel_nonorm(h_ref, r_ref, t_ref, o_ref):
    """Same as above but without the normalize step (normalize=False path)."""
    o_ref[...] = _row_l2_as_lane_row(h_ref[...] + r_ref[...] - t_ref[...])


def _pick_batch_tile(batch, dim, *, dtype_bytes=4, per_buffer_bytes=3 << 20,
                     max_rows=8192):
    """Pick a batch tile TB (multiple of 128, <= max_rows).

    Footprint is computed with the lane-padded embedding dim (VMEM tiles pad the last
    dim to a multiple of 128), targeting ~per_buffer_bytes per pipelined input buffer
    (3 inputs x 2 buffers => total ~6x that, well under the 40 MiB vmem limit we set).
    """
    d_pad = ((dim + 127) // 128) * 128
    tb = per_buffer_bytes // (d_pad * dtype_bytes)
    tb = max(128, min(max_rows, (tb // 128) * 128))
    batch_pad128 = ((batch + 127) // 128) * 128
    return min(tb, batch_pad128)


def transe_forward(entity_emb, relation_emb, triples, normalize=True, *,
                   per_buffer_bytes=3 << 20, max_tile_rows=8192,
                   vmem_limit_bytes=40 << 20):
    """TransE forward: scores (L2 distances) for (head, relation, tail) triples.

    entity_emb   : (entity_count, D) float32
    relation_emb : (relation_count, D) float32
    triples      : (B, 3) int32
    returns      : (B,) float32
    """
    B = triples.shape[0]
    D = entity_emb.shape[1]

    TB = _pick_batch_tile(B, D, per_buffer_bytes=per_buffer_bytes,
                          max_rows=max_tile_rows)
    num_tiles = pl.cdiv(B, TB)
    B_pad = num_tiles * TB

    triples = triples.astype(jnp.int32)
    if B_pad != B:
        # Pad the *indices* (12 B/row) instead of the gathered (B, D) arrays: avoids
        # materializing up to 3 extra full (B_pad, D) copies.  Index 0 is a valid row,
        # so padded rows gather real embeddings; their distances are sliced off below.
        triples = jnp.pad(triples, ((0, B_pad - B), (0, 0)))

    # Embedding lookup (glue — plain XLA gather; see TODO(synk) above for the fused path).
    heads = jnp.take(entity_emb, triples[:, 0], axis=0)
    relations = jnp.take(relation_emb, triples[:, 1], axis=0)
    tails = jnp.take(entity_emb, triples[:, 2], axis=0)

    kernel = _transe_kernel if normalize else _transe_kernel_nonorm

    out = pl.pallas_call(
        kernel,
        out_shape=jax.ShapeDtypeStruct((1, B_pad), jnp.float32),
        grid_spec=pltpu.PrefetchScalarGridSpec(
            num_scalar_prefetch=0,
            grid=(num_tiles,),
            in_specs=[
                pl.BlockSpec((TB, D), lambda i: (i, 0)),
                pl.BlockSpec((TB, D), lambda i: (i, 0)),
                pl.BlockSpec((TB, D), lambda i: (i, 0)),
            ],
            # Lane-dense output row: (1, TB) blocks of a (1, B_pad) array.
            out_specs=pl.BlockSpec((1, TB), lambda i: (0, i)),
        ),
        compiler_params=pltpu.CompilerParams(
            # Rows are independent -> parallel batch axis.
            # TODO(synk): check v7x dual-TC sharding; use pltpu.CORE_PARALLEL if needed.
            dimension_semantics=("parallel",),
            vmem_limit_bytes=vmem_limit_bytes,
        ),
    )(heads, relations, tails)

    return out[0, :B]


def init_transe_params(key, entity_count, relation_count, embedding_dim):
    """Deterministic parameter init matching the PyTorch module's init range."""
    bound = 6.0 / np.sqrt(embedding_dim)
    k_ent, k_rel = jax.random.split(key)
    entity_emb = jax.random.uniform(
        k_ent, (entity_count, embedding_dim), dtype=jnp.float32,
        minval=-bound, maxval=bound)
    relation_emb = jax.random.uniform(
        k_rel, (relation_count, embedding_dim), dtype=jnp.float32,
        minval=-bound, maxval=bound)
    return entity_emb, relation_emb


def _reference_forward(entity_emb, relation_emb, triples, normalize=True):
    """Pure-JAX reference for correctness checking."""
    eps = 1e-12
    h = jnp.take(entity_emb, triples[:, 0], axis=0)
    r = jnp.take(relation_emb, triples[:, 1], axis=0)
    t = jnp.take(entity_emb, triples[:, 2], axis=0)
    if normalize:
        def n(x):
            return x / jnp.maximum(jnp.linalg.norm(x, axis=1, keepdims=True), eps)
        h, r, t = n(h), n(r), n(t)
    return jnp.linalg.norm(h + r - t, axis=1)


def _make_triples(key, batch, entity_count, relation_count):
    k_h, k_r, k_t = jax.random.split(key, 3)
    heads_idx = jax.random.randint(k_h, (batch,), 0, entity_count)
    rels_idx = jax.random.randint(k_r, (batch,), 0, relation_count)
    tails_idx = jax.random.randint(k_t, (batch,), 0, entity_count)
    return jnp.stack([heads_idx, rels_idx, tails_idx], axis=1).astype(jnp.int32)


def _check(entity_emb, relation_emb, triples, normalize, **kw):
    got = jax.block_until_ready(
        transe_forward(entity_emb, relation_emb, triples, normalize=normalize, **kw))
    ref = _reference_forward(entity_emb, relation_emb, triples, normalize=normalize)
    np.testing.assert_allclose(np.asarray(got), np.asarray(ref), rtol=1e-5, atol=1e-5)


if __name__ == "__main__":
    key = jax.random.PRNGKey(0)
    k1, k2, k3, k4 = jax.random.split(key, 4)

    # --- Test 1: small module-like shapes (single tile) ---------------------------------
    entity_count, relation_count, embedding_dim, batch = 50, 10, 32, 8
    entity_emb, relation_emb = init_transe_params(
        k1, entity_count, relation_count, embedding_dim)
    triples = _make_triples(k2, batch, entity_count, relation_count)
    _check(entity_emb, relation_emb, triples, normalize=True)    # default PyTorch path
    _check(entity_emb, relation_emb, triples, normalize=False)

    # --- Test 2: larger D, multi-tile grid + batch padding (forces TB=128, 2 tiles) -----
    entity_count2, relation_count2, embedding_dim2, batch2 = 64, 16, 256, 200
    entity_emb2, relation_emb2 = init_transe_params(
        k3, entity_count2, relation_count2, embedding_dim2)
    triples2 = _make_triples(k4, batch2, entity_count2, relation_count2)
    small_buf = 128 * embedding_dim2 * 4   # force TB=128 -> exercises pipeline + padding
    _check(entity_emb2, relation_emb2, triples2, normalize=True,
           per_buffer_bytes=small_buf)
    _check(entity_emb2, relation_emb2, triples2, normalize=False,
           per_buffer_bytes=small_buf)

    print("KERNEL_OK")
</pallas_src>

<mosaic_0001>
module attributes {stable_mosaic.version = 11 : i64} {
  func.func @_transe_kernel(%arg0: i32, %arg1: memref<128x32xf32, #tpu.memory_space<vmem>>, %arg2: memref<128x32xf32, #tpu.memory_space<vmem>>, %arg3: memref<128x32xf32, #tpu.memory_space<vmem>>, %arg4: memref<1x128xf32, #tpu.memory_space<vmem>>) attributes {dimension_semantics = [#tpu.dimension_semantics<parallel>], iteration_bounds = array<i64: 1>, scalar_prefetch = 0 : i64, scratch_operands = 0 : i64, tpu.core_type = #tpu.core_type<tc>, window_params = [{transform_indices = @transform_0, window_bounds = array<i64: 128, 32>}, {transform_indices = @transform_1, window_bounds = array<i64: 128, 32>}, {transform_indices = @transform_2, window_bounds = array<i64: 128, 32>}, {transform_indices = @transform_3, window_bounds = array<i64: 1, 128>}]} {
    %c0 = arith.constant 0 : index
    %c0_0 = arith.constant 0 : index
    %0 = vector.load %arg1[%c0, %c0_0] : memref<128x32xf32, #tpu.memory_space<vmem>>, vector<128x32xf32>
    %1 = arith.mulf %0, %0 : vector<128x32xf32>
    %cst = arith.constant dense<0.000000e+00> : vector<128xf32>
    %2 = vector.multi_reduction <add>, %1, %cst [1] : vector<128x32xf32> to vector<128xf32>
    %3 = vector.shape_cast %2 : vector<128xf32> to vector<128x1xf32>
    %cst_1 = arith.constant 1.000000e-24 : f32
    %4 = vector.broadcast %cst_1 : f32 to vector<128x1xf32>
    %5 = arith.maximumf %3, %4 : vector<128x1xf32>
    %6 = math.rsqrt %5 : vector<128x1xf32>
    %7 = vector.broadcast %6 : vector<128x1xf32> to vector<128x32xf32>
    %8 = arith.mulf %0, %7 : vector<128x32xf32>
    %c0_2 = arith.constant 0 : index
    %c0_3 = arith.constant 0 : index
    %9 = vector.load %arg2[%c0_2, %c0_3] : memref<128x32xf32, #tpu.memory_space<vmem>>, vector<128x32xf32>
    %10 = arith.mulf %9, %9 : vector<128x32xf32>
    %cst_4 = arith.constant dense<0.000000e+00> : vector<128xf32>
    %11 = vector.multi_reduction <add>, %10, %cst_4 [1] : vector<128x32xf32> to vector<128xf32>
    %12 = vector.shape_cast %11 : vector<128xf32> to vector<128x1xf32>
    %cst_5 = arith.constant 1.000000e-24 : f32
    %13 = vector.broadcast %cst_5 : f32 to vector<128x1xf32>
    %14 = arith.maximumf %12, %13 : vector<128x1xf32>
    %15 = math.rsqrt %14 : vector<128x1xf32>
    %16 = vector.broadcast %15 : vector<128x1xf32> to vector<128x32xf32>
    %17 = arith.mulf %9, %16 : vector<128x32xf32>
    %c0_6 = arith.constant 0 : index
    %c0_7 = arith.constant 0 : index
    %18 = vector.load %arg3[%c0_6, %c0_7] : memref<128x32xf32, #tpu.memory_space<vmem>>, vector<128x32xf32>
    %19 = arith.mulf %18, %18 : vector<128x32xf32>
    %cst_8 = arith.constant dense<0.000000e+00> : vector<128xf32>
    %20 = vector.multi_reduction <add>, %19, %cst_8 [1] : vector<128x32xf32> to vector<128xf32>
    %21 = vector.shape_cast %20 : vector<128xf32> to vector<128x1xf32>
    %cst_9 = arith.constant 1.000000e-24 : f32
    %22 = vector.broadcast %cst_9 : f32 to vector<128x1xf32>
    %23 = arith.maximumf %21, %22 : vector<128x1xf32>
    %24 = math.rsqrt %23 : vector<128x1xf32>
    %25 = vector.broadcast %24 : vector<128x1xf32> to vector<128x32xf32>
    %26 = arith.mulf %18, %25 : vector<128x32xf32>
    %27 = arith.addf %8, %17 : vector<128x32xf32>
    %28 = arith.subf %27, %26 : vector<128x32xf32>
    %29 = arith.mulf %28, %28 : vector<128x32xf32>
    %cst_10 = arith.constant 1.000000e+00 : f32
    %30 = vector.broadcast %cst_10 : f32 to vector<1x32xf32>
    %cst_11 = arith.constant dense<0.000000e+00> : vector<1x128xf32>
    %31 = tpu.matmul %30, %29, %cst_11 {dimension_numbers = #tpu.dot_dimension_numbers<[1], [1], [0], [0], [0, 0, 1, 0], [], []>, precision = #tpu.contract_precision<fp32>} : vector<1x32xf32>, vector<128x32xf32>, vector<1x128xf32> -> vector<1x128xf32>
    %32 = math.sqrt %31 : vector<1x128xf32>
    %c0_12 = arith.constant 0 : index
    %c0_13 = arith.constant 0 : index
    %33 = vector.load %arg4[%c0_12, %c0_13] : memref<1x128xf32, #tpu.memory_space<vmem>>, vector<1x128xf32>
    tpu.vector_store %arg4[%c0_12, %c0_13], %32 {strides = array<i32>} : memref<1x128xf32, #tpu.memory_space<vmem>>, vector<1x128xf32>,
    return
  }
  func.func @transform_0(%arg0: i32) -> (i32, i32) {
    %c0_i32 = arith.constant 0 : i32
    %c0_i32_0 = arith.constant 0 : i32
    return %arg0, %c0_i32 : i32, i32
  }
  func.func @transform_1(%arg0: i32) -> (i32, i32) {
    %c0_i32 = arith.constant 0 : i32
    %c0_i32_0 = arith.constant 0 : i32
    return %arg0, %c0_i32 : i32, i32
  }
  func.func @transform_2(%arg0: i32) -> (i32, i32) {
    %c0_i32 = arith.constant 0 : i32
    %c0_i32_0 = arith.constant 0 : i32
    return %arg0, %c0_i32 : i32, i32
  }
  func.func @transform_3(%arg0: i32) -> (i32, i32) {
    %c0_i32 = arith.constant 0 : i32
    %c0_i32_0 = arith.constant 0 : i32
    return %c0_i32, %arg0 : i32, i32
  }
}

</mosaic_0001>

<llo_original>
// kernel: tpu_custom_call.1
$region0: #{tpu_custom_call.1}
  #allocation0 [shape = 'u32[]', space=smem, size = 0x4, offset = 0x4, fixed_abs, tag = 'smem constant byte address 0x4 - core index']
  #allocation1 [shape = 'u32[144,128]{1,0:T(1,128)}', space=vmem, size = 0x12000, scoped, tag = 'internal scratch']
  %s0 = inlined_call_operand.vmem [shape: f32[128,32], index: 0, kind: input, shape index: {}]
  %s1 = inlined_call_operand.vmem [shape: f32[128,32], index: 1, kind: input, shape index: {}]
  %s2 = inlined_call_operand.vmem [shape: f32[128,32], index: 2, kind: input, shape index: {}]
  %s3 = inlined_call_operand.hbm [shape: f32[1,128], index: 3, kind: output, shape index: {}]
  %s4 = sld [smem:[#allocation0]]
  $region22: #{tpu_custom_call.1} parent=0
    _
  %s6 = ssub.s32 1, %s4
  %s7 = scalar_select 0, %s6, %s4
  $region1: #{tpu_custom_call.1} parent=0
    #allocation2 [shape = 'u8[512]{0}', space=vmem, size = 0x400, scoped, tag = 'output window, operand 0, single buffered']
    #allocation3 [shape = 's32[1]{0}', space=sflag, size = 0x4, scoped, tag = 'scoped memory for tpu_custom_call.1']
    %8 = vsyncpa [#allocation3], 0
    // Predicated region
    $region2: #{tpu_custom_call.1} parent=1 // pred_check
      _
    $region3: #{tpu_custom_call.1} parent=1 // pred_check_branch
      %10 = sbr.rel (0) target = $region5
    $region4: #{tpu_custom_call.1} parent=1 // pred_region
      _
    $region5: #{tpu_custom_call.1} parent=1 // pred_fallthru
      _
    // Predicated region
    $region6: #{tpu_custom_call.1} parent=1 // pred_check
      _
    $region7: #{tpu_custom_call.1} parent=1 // pred_check_branch
      %12 = sbr.rel (0) target = $region9
    $region8: #{tpu_custom_call.1} parent=1 // pred_region
      _
    $region9: #{tpu_custom_call.1} parent=1 // pred_fallthru
      _
    // Predicated region
    $region10: #{tpu_custom_call.1} parent=1 // pred_check
      _
    $region11: #{tpu_custom_call.1} parent=1 // pred_check_branch
      %14 = sbr.rel (0) target = $region13
    $region12: #{tpu_custom_call.1} parent=1 // pred_region
      _
    $region13: #{tpu_custom_call.1} parent=1 // pred_fallthru
      _
    %v15 = vld [vmem:[%s0] sm:$0xff]
    %v16 = vld [vmem:[%s0 + $0x8] sm:$0xff]
    %v17 = vld [vmem:[%s0 + $0x10] sm:$0xff]
    %v18 = vld [vmem:[%s0 + $0x18] sm:$0xff]
    %v19 = vld [vmem:[%s0 + $0x20] sm:$0xff]
    %v20 = vld [vmem:[%s0 + $0x28] sm:$0xff]
    %v21 = vld [vmem:[%s0 + $0x30] sm:$0xff]
    %v22 = vld [vmem:[%s0 + $0x38] sm:$0xff]
    %v23 = vld [vmem:[%s0 + $0x40] sm:$0xff]
    %v24 = vld [vmem:[%s0 + $0x48] sm:$0xff]
    %v25 = vld [vmem:[%s0 + $0x50] sm:$0xff]
    %v26 = vld [vmem:[%s0 + $0x58] sm:$0xff]
    %v27 = vld [vmem:[%s0 + $0x60] sm:$0xff]
    %v28 = vld [vmem:[%s0 + $0x68] sm:$0xff]
    %v29 = vld [vmem:[%s0 + $0x70] sm:$0xff]
    %v30 = vld [vmem:[%s0 + $0x78] sm:$0xff]
    %v31 = vmul.f32 %v15, %v15
    %v32 = vmul.f32 %v16, %v16
    %v33 = vmul.f32 %v17, %v17
    %v34 = vmul.f32 %v18, %v18
    %v35 = vmul.f32 %v19, %v19
    %v36 = vmul.f32 %v20, %v20
    %v37 = vmul.f32 %v21, %v21
    %v38 = vmul.f32 %v22, %v22
    %v39 = vmul.f32 %v23, %v23
    %v40 = vmul.f32 %v24, %v24
    %v41 = vmul.f32 %v25, %v25
    %v42 = vmul.f32 %v26, %v26
    %v43 = vmul.f32 %v27, %v27
    %v44 = vmul.f32 %v28, %v28
    %v45 = vmul.f32 %v29, %v29
    %v46 = vmul.f32 %v30, %v30
    %vm47 = vcmask 261120
    %v48 = vsel %vm47, %v31, 0.0
    %49 = vadd.xlane.f32.xlu0 %v48
    %v50 = vpop.xlane.xlu0 %49
    %v51 = vsel %vm47, %v32, 0.0
    %52 = vadd.xlane.f32.xlu0 %v51
    %v53 = vpop.xlane.xlu0 %52
    %v54 = vsel %vm47, %v33, 0.0
    %55 = vadd.xlane.f32.xlu0 %v54
    %v56 = vpop.xlane.xlu0 %55
    %v57 = vsel %vm47, %v34, 0.0
    %58 = vadd.xlane.f32.xlu0 %v57
    %v59 = vpop.xlane.xlu0 %58
    %v60 = vsel %vm47, %v35, 0.0
    %61 = vadd.xlane.f32.xlu0 %v60
    %v62 = vpop.xlane.xlu0 %61
    %v63 = vsel %vm47, %v36, 0.0
    %64 = vadd.xlane.f32.xlu0 %v63
    %v65 = vpop.xlane.xlu0 %64
    %v66 = vsel %vm47, %v37, 0.0
    %67 = vadd.xlane.f32.xlu0 %v66
    %v68 = vpop.xlane.xlu0 %67
    %v69 = vsel %vm47, %v38, 0.0
    %70 = vadd.xlane.f32.xlu0 %v69
    %v71 = vpop.xlane.xlu0 %70
    %v72 = vsel %vm47, %v39, 0.0
    %73 = vadd.xlane.f32.xlu0 %v72
    %v74 = vpop.xlane.xlu0 %73
    %v75 = vsel %vm47, %v40, 0.0
    %76 = vadd.xlane.f32.xlu0 %v75
    %v77 = vpop.xlane.xlu0 %76
    %v78 = vsel %vm47, %v41, 0.0
    %79 = vadd.xlane.f32.xlu0 %v78
    %v80 = vpop.xlane.xlu0 %79
    %v81 = vsel %vm47, %v42, 0.0
    %82 = vadd.xlane.f32.xlu0 %v81
    %v83 = vpop.xlane.xlu0 %82
    %v84 = vsel %vm47, %v43, 0.0
    %85 = vadd.xlane.f32.xlu0 %v84
    %v86 = vpop.xlane.xlu0 %85
    %v87 = vsel %vm47, %v44, 0.0
    %88 = vadd.xlane.f32.xlu0 %v87
    %v89 = vpop.xlane.xlu0 %88
    %v90 = vsel %vm47, %v45, 0.0
    %91 = vadd.xlane.f32.xlu0 %v90
    %v92 = vpop.xlane.xlu0 %91
    %v93 = vsel %vm47, %v46, 0.0
    %94 = vadd.xlane.f32.xlu0 %v93
    %v95 = vpop.xlane.xlu0 %94
    %v96 = vmax.f32 %v50, 1e-24
    %v97 = vmax.f32 %v53, 1e-24
    %v98 = vmax.f32 %v56, 1e-24
    %v99 = vmax.f32 %v59, 1e-24
    %v100 = vmax.f32 %v62, 1e-24
    %v101 = vmax.f32 %v65, 1e-24
    %v102 = vmax.f32 %v68, 1e-24
    %v103 = vmax.f32 %v71, 1e-24
    %v104 = vmax.f32 %v74, 1e-24
    %v105 = vmax.f32 %v77, 1e-24
    %v106 = vmax.f32 %v80, 1e-24
    %v107 = vmax.f32 %v83, 1e-24
    %v108 = vmax.f32 %v86, 1e-24
    %v109 = vmax.f32 %v89, 1e-24
    %v110 = vmax.f32 %v92, 1e-24
    %v111 = vmax.f32 %v95, 1e-24
    %v112 = vrsqrt.pop %v96
    %v113 = vrsqrt.pop %v97
    %v114 = vrsqrt.pop %v98
    %v115 = vrsqrt.pop %v99
    %v116 = vrsqrt.pop %v100
    %v117 = vrsqrt.pop %v101
    %v118 = vrsqrt.pop %v102
    %v119 = vrsqrt.pop %v103
    %v120 = vrsqrt.pop %v104
    %v121 = vrsqrt.pop %v105
    %v122 = vrsqrt.pop %v106
    %v123 = vrsqrt.pop %v107
    %v124 = vrsqrt.pop %v108
    %v125 = vrsqrt.pop %v109
    %v126 = vrsqrt.pop %v110
    %v127 = vrsqrt.pop %v111
    %v128 = vmul.f32 %v15, %v112
    %v129 = vmul.f32 %v16, %v113
    %v130 = vmul.f32 %v17, %v114
    %v131 = vmul.f32 %v18, %v115
    %v132 = vmul.f32 %v19, %v116
    %v133 = vmul.f32 %v20, %v117
    %v134 = vmul.f32 %v21, %v118
    %v135 = vmul.f32 %v22, %v119
    %v136 = vmul.f32 %v23, %v120
    %v137 = vmul.f32 %v24, %v121
    %v138 = vmul.f32 %v25, %v122
    %v139 = vmul.f32 %v26, %v123
    %v140 = vmul.f32 %v27, %v124
    %v141 = vmul.f32 %v28, %v125
    %v142 = vmul.f32 %v29, %v126
    %v143 = vmul.f32 %v30, %v127
    %v144 = vld [vmem:[%s1] sm:$0xff]
    %v145 = vld [vmem:[%s1 + $0x8] sm:$0xff]
    %v146 = vld [vmem:[%s1 + $0x10] sm:$0xff]
    %v147 = vld [vmem:[%s1 + $0x18] sm:$0xff]
    %v148 = vld [vmem:[%s1 + $0x20] sm:$0xff]
    %v149 = vld [vmem:[%s1 + $0x28] sm:$0xff]
    %v150 = vld [vmem:[%s1 + $0x30] sm:$0xff]
    %v151 = vld [vmem:[%s1 + $0x38] sm:$0xff]
    %v152 = vld [vmem:[%s1 + $0x40] sm:$0xff]
    %v153 = vld [vmem:[%s1 + $0x48] sm:$0xff]
    %v154 = vld [vmem:[%s1 + $0x50] sm:$0xff]
    %v155 = vld [vmem:[%s1 + $0x58] sm:$0xff]
    %v156 = vld [vmem:[%s1 + $0x60] sm:$0xff]
    %v157 = vld [vmem:[%s1 + $0x68] sm:$0xff]
    %v158 = vld [vmem:[%s1 + $0x70] sm:$0xff]
    %v159 = vld [vmem:[%s1 + $0x78] sm:$0xff]
    %v160 = vmul.f32 %v144, %v144
    %v161 = vmul.f32 %v145, %v145
    %v162 = vmul.f32 %v146, %v146
    %v163 = vmul.f32 %v147, %v147
    %v164 = vmul.f32 %v148, %v148
    %v165 = vmul.f32 %v149, %v149
    %v166 = vmul.f32 %v150, %v150
    %v167 = vmul.f32 %v151, %v151
    %v168 = vmul.f32 %v152, %v152
    %v169 = vmul.f32 %v153, %v153
    %v170 = vmul.f32 %v154, %v154
    %v171 = vmul.f32 %v155, %v155
    %v172 = vmul.f32 %v156, %v156
    %v173 = vmul.f32 %v157, %v157
    %v174 = vmul.f32 %v158, %v158
    %v175 = vmul.f32 %v159, %v159
    %v176 = vsel %vm47, %v160, 0.0
    %177 = vadd.xlane.f32.xlu0 %v176
    %v178 = vpop.xlane.xlu0 %177
    %v179 = vsel %vm47, %v161, 0.0
    %180 = vadd.xlane.f32.xlu0 %v179
    %v181 = vpop.xlane.xlu0 %180
    %v182 = vsel %vm47, %v162, 0.0
    %183 = vadd.xlane.f32.xlu0 %v182
    %v184 = vpop.xlane.xlu0 %183
    %v185 = vsel %vm47, %v163, 0.0
    %186 = vadd.xlane.f32.xlu0 %v185
    %v187 = vpop.xlane.xlu0 %186
    %v188 = vsel %vm47, %v164, 0.0
    %189 = vadd.xlane.f32.xlu0 %v188
    %v190 = vpop.xlane.xlu0 %189
    %v191 = vsel %vm47, %v165, 0.0
    %192 = vadd.xlane.f32.xlu0 %v191
    %v193 = vpop.xlane.xlu0 %192
    %v194 = vsel %vm47, %v166, 0.0
    %195 = vadd.xlane.f32.xlu0 %v194
    %v196 = vpop.xlane.xlu0 %195
    %v197 = vsel %vm47, %v167, 0.0
    %198 = vadd.xlane.f32.xlu0 %v197
    %v199 = vpop.xlane.xlu0 %198
    %v200 = vsel %vm47, %v168, 0.0
    %201 = vadd.xlane.f32.xlu0 %v200
    %v202 = vpop.xlane.xlu0 %201
    %v203 = vsel %vm47, %v169, 0.0
    %204 = vadd.xlane.f32.xlu0 %v203
    %v205 = vpop.xlane.xlu0 %204
    %v206 = vsel %vm47, %v170, 0.0
    %207 = vadd.xlane.f32.xlu0 %v206
    %v208 = vpop.xlane.xlu0 %207
    %v209 = vsel %vm47, %v171, 0.0
    %210 = vadd.xlane.f32.xlu0 %v209
    %v211 = vpop.xlane.xlu0 %210
    %v212 = vsel %vm47, %v172, 0.0
    %213 = vadd.xlane.f32.xlu0 %v212
    %v214 = vpop.xlane.xlu0 %213
    %v215 = vsel %vm47, %v173, 0.0
    %216 = vadd.xlane.f32.xlu0 %v215
    %v217 = vpop.xlane.xlu0 %216
    %v218 = vsel %vm47, %v174, 0.0
    %219 = vadd.xlane.f32.xlu0 %v218
    %v220 = vpop.xlane.xlu0 %219
    %v221 = vsel %vm47, %v175, 0.0
    %222 = vadd.xlane.f32.xlu0 %v221
    %v223 = vpop.xlane.xlu0 %222
    %v224 = vmax.f32 %v178, 1e-24
    %v225 = vmax.f32 %v181, 1e-24
    %v226 = vmax.f32 %v184, 1e-24
    %v227 = vmax.f32 %v187, 1e-24
    %v228 = vmax.f32 %v190, 1e-24
    %v229 = vmax.f32 %v193, 1e-24
    %v230 = vmax.f32 %v196, 1e-24
    %v231 = vmax.f32 %v199, 1e-24
    %v232 = vmax.f32 %v202, 1e-24
    %v233 = vmax.f32 %v205, 1e-24
    %v234 = vmax.f32 %v208, 1e-24
    %v235 = vmax.f32 %v211, 1e-24
    %v236 = vmax.f32 %v214, 1e-24
    %v237 = vmax.f32 %v217, 1e-24
    %v238 = vmax.f32 %v220, 1e-24
    %v239 = vmax.f32 %v223, 1e-24
    %v240 = vrsqrt.pop %v224
    %v241 = vrsqrt.pop %v225
    %v242 = vrsqrt.pop %v226
    %v243 = vrsqrt.pop %v227
    %v244 = vrsqrt.pop %v228
    %v245 = vrsqrt.pop %v229
    %v246 = vrsqrt.pop %v230
    %v247 = vrsqrt.pop %v231
    %v248 = vrsqrt.pop %v232
    %v249 = vrsqrt.pop %v233
    %v250 = vrsqrt.pop %v234
    %v251 = vrsqrt.pop %v235
    %v252 = vrsqrt.pop %v236
    %v253 = vrsqrt.pop %v237
    %v254 = vrsqrt.pop %v238
    %v255 = vrsqrt.pop %v239
    %v256 = vmul.f32 %v144, %v240
    %v257 = vmul.f32 %v145, %v241
    %v258 = vmul.f32 %v146, %v242
    %v259 = vmul.f32 %v147, %v243
    %v260 = vmul.f32 %v148, %v244
    %v261 = vmul.f32 %v149, %v245
    %v262 = vmul.f32 %v150, %v246
    %v263 = vmul.f32 %v151, %v247
    %v264 = vmul.f32 %v152, %v248
    %v265 = vmul.f32 %v153, %v249
    %v266 = vmul.f32 %v154, %v250
    %v267 = vmul.f32 %v155, %v251
    %v268 = vmul.f32 %v156, %v252
    %v269 = vmul.f32 %v157, %v253
    %v270 = vmul.f32 %v158, %v254
    %v271 = vmul.f32 %v159, %v255
    %v272 = vld [vmem:[%s2] sm:$0xff]
    %v273 = vld [vmem:[%s2 + $0x8] sm:$0xff]
    %v274 = vld [vmem:[%s2 + $0x10] sm:$0xff]
    %v275 = vld [vmem:[%s2 + $0x18] sm:$0xff]
    %v276 = vld [vmem:[%s2 + $0x20] sm:$0xff]
    %v277 = vld [vmem:[%s2 + $0x28] sm:$0xff]
    %v278 = vld [vmem:[%s2 + $0x30] sm:$0xff]
    %v279 = vld [vmem:[%s2 + $0x38] sm:$0xff]
    %v280 = vld [vmem:[%s2 + $0x40] sm:$0xff]
    %v281 = vld [vmem:[%s2 + $0x48] sm:$0xff]
    %v282 = vld [vmem:[%s2 + $0x50] sm:$0xff]
    %v283 = vld [vmem:[%s2 + $0x58] sm:$0xff]
    %v284 = vld [vmem:[%s2 + $0x60] sm:$0xff]
    %v285 = vld [vmem:[%s2 + $0x68] sm:$0xff]
    %v286 = vld [vmem:[%s2 + $0x70] sm:$0xff]
    %v287 = vld [vmem:[%s2 + $0x78] sm:$0xff]
    %v288 = vmul.f32 %v272, %v272
    %v289 = vmul.f32 %v273, %v273
    %v290 = vmul.f32 %v274, %v274
    %v291 = vmul.f32 %v275, %v275
    %v292 = vmul.f32 %v276, %v276
    %v293 = vmul.f32 %v277, %v277
    %v294 = vmul.f32 %v278, %v278
    %v295 = vmul.f32 %v279, %v279
    %v296 = vmul.f32 %v280, %v280
    %v297 = vmul.f32 %v281, %v281
    %v298 = vmul.f32 %v282, %v282
    %v299 = vmul.f32 %v283, %v283
    %v300 = vmul.f32 %v284, %v284
    %v301 = vmul.f32 %v285, %v285
    %v302 = vmul.f32 %v286, %v286
    %v303 = vmul.f32 %v287, %v287
    %v304 = vsel %vm47, %v288, 0.0
    %305 = vadd.xlane.f32.xlu0 %v304
    %v306 = vpop.xlane.xlu0 %305
    %v307 = vsel %vm47, %v289, 0.0
    %308 = vadd.xlane.f32.xlu0 %v307
    %v309 = vpop.xlane.xlu0 %308
    %v310 = vsel %vm47, %v290, 0.0
    %311 = vadd.xlane.f32.xlu0 %v310
    %v312 = vpop.xlane.xlu0 %311
    %v313 = vsel %vm47, %v291, 0.0
    %314 = vadd.xlane.f32.xlu0 %v313
    %v315 = vpop.xlane.xlu0 %314
    %v316 = vsel %vm47, %v292, 0.0
    %317 = vadd.xlane.f32.xlu0 %v316
    %v318 = vpop.xlane.xlu0 %317
    %v319 = vsel %vm47, %v293, 0.0
    %320 = vadd.xlane.f32.xlu0 %v319
    %v321 = vpop.xlane.xlu0 %320
    %v322 = vsel %vm47, %v294, 0.0
    %323 = vadd.xlane.f32.xlu0 %v322
    %v324 = vpop.xlane.xlu0 %323
    %v325 = vsel %vm47, %v295, 0.0
    %326 = vadd.xlane.f32.xlu0 %v325
    %v327 = vpop.xlane.xlu0 %326
    %v328 = vsel %vm47, %v296, 0.0
    %329 = vadd.xlane.f32.xlu0 %v328
    %v330 = vpop.xlane.xlu0 %329
    %v331 = vsel %vm47, %v297, 0.0
    %332 = vadd.xlane.f32.xlu0 %v331
    %v333 = vpop.xlane.xlu0 %332
    %v334 = vsel %vm47, %v298, 0.0
    %335 = vadd.xlane.f32.xlu0 %v334
    %v336 = vpop.xlane.xlu0 %335
    %v337 = vsel %vm47, %v299, 0.0
    %338 = vadd.xlane.f32.xlu0 %v337
    %v339 = vpop.xlane.xlu0 %338
    %v340 = vsel %vm47, %v300, 0.0
    %341 = vadd.xlane.f32.xlu0 %v340
    %v342 = vpop.xlane.xlu0 %341
    %v343 = vsel %vm47, %v301, 0.0
    %344 = vadd.xlane.f32.xlu0 %v343
    %v345 = vpop.xlane.xlu0 %344
    %v346 = vsel %vm47, %v302, 0.0
    %347 = vadd.xlane.f32.xlu0 %v346
    %v348 = vpop.xlane.xlu0 %347
    %v349 = vsel %vm47, %v303, 0.0
    %350 = vadd.xlane.f32.xlu0 %v349
    %v351 = vpop.xlane.xlu0 %350
    %v352 = vmax.f32 %v306, 1e-24
    %v353 = vmax.f32 %v309, 1e-24
    %v354 = vmax.f32 %v312, 1e-24
    %v355 = vmax.f32 %v315, 1e-24
    %v356 = vmax.f32 %v318, 1e-24
    %v357 = vmax.f32 %v321, 1e-24
    %v358 = vmax.f32 %v324, 1e-24
    %v359 = vmax.f32 %v327, 1e-24
    %v360 = vmax.f32 %v330, 1e-24
    %v361 = vmax.f32 %v333, 1e-24
    %v362 = vmax.f32 %v336, 1e-24
    %v363 = vmax.f32 %v339, 1e-24
    %v364 = vmax.f32 %v342, 1e-24
    %v365 = vmax.f32 %v345, 1e-24
    %v366 = vmax.f32 %v348, 1e-24
    %v367 = vmax.f32 %v351, 1e-24
    %v368 = vrsqrt.pop %v352
    %v369 = vrsqrt.pop %v353
    %v370 = vrsqrt.pop %v354
    %v371 = vrsqrt.pop %v355
    %v372 = vrsqrt.pop %v356
    %v373 = vrsqrt.pop %v357
    %v374 = vrsqrt.pop %v358
    %v375 = vrsqrt.pop %v359
    %v376 = vrsqrt.pop %v360
    %v377 = vrsqrt.pop %v361
    %v378 = vrsqrt.pop %v362
    %v379 = vrsqrt.pop %v363
    %v380 = vrsqrt.pop %v364
    %v381 = vrsqrt.pop %v365
    %v382 = vrsqrt.pop %v366
    %v383 = vrsqrt.pop %v367
    %v384 = vmul.f32 %v272, %v368
    %v385 = vmul.f32 %v273, %v369
    %v386 = vmul.f32 %v274, %v370
    %v387 = vmul.f32 %v275, %v371
    %v388 = vmul.f32 %v276, %v372
    %v389 = vmul.f32 %v277, %v373
    %v390 = vmul.f32 %v278, %v374
    %v391 = vmul.f32 %v279, %v375
    %v392 = vmul.f32 %v280, %v376
    %v393 = vmul.f32 %v281, %v377
    %v394 = vmul.f32 %v282, %v378
    %v395 = vmul.f32 %v283, %v379
    %v396 = vmul.f32 %v284, %v380
    %v397 = vmul.f32 %v285, %v381
    %v398 = vmul.f32 %v286, %v382
    %v399 = vmul.f32 %v287, %v383
    %v400 = vadd.f32 %v128, %v256
    %v401 = vadd.f32 %v129, %v257
    %v402 = vadd.f32 %v130, %v258
    %v403 = vadd.f32 %v131, %v259
    %v404 = vadd.f32 %v132, %v260
    %v405 = vadd.f32 %v133, %v261
    %v406 = vadd.f32 %v134, %v262
    %v407 = vadd.f32 %v135, %v263
    %v408 = vadd.f32 %v136, %v264
    %v409 = vadd.f32 %v137, %v265
    %v410 = vadd.f32 %v138, %v266
    %v411 = vadd.f32 %v139, %v267
    %v412 = vadd.f32 %v140, %v268
    %v413 = vadd.f32 %v141, %v269
    %v414 = vadd.f32 %v142, %v270
    %v415 = vadd.f32 %v143, %v271
    %v416 = vsub.f32 %v400, %v384
    %v417 = vsub.f32 %v401, %v385
    %v418 = vsub.f32 %v402, %v386
    %v419 = vsub.f32 %v403, %v387
    %v420 = vsub.f32 %v404, %v388
    %v421 = vsub.f32 %v405, %v389
    %v422 = vsub.f32 %v406, %v390
    %v423 = vsub.f32 %v407, %v391
    %v424 = vsub.f32 %v408, %v392
    %v425 = vsub.f32 %v409, %v393
    %v426 = vsub.f32 %v410, %v394
    %v427 = vsub.f32 %v411, %v395
    %v428 = vsub.f32 %v412, %v396
    %v429 = vsub.f32 %v413, %v397
    %v430 = vsub.f32 %v414, %v398
    %v431 = vsub.f32 %v415, %v399
    %v432 = vmul.f32 %v416, %v416
    %v433 = vmul.f32 %v417, %v417
    %v434 = vmul.f32 %v418, %v418
    %v435 = vmul.f32 %v419, %v419
    %v436 = vmul.f32 %v420, %v420
    %v437 = vmul.f32 %v421, %v421
    %v438 = vmul.f32 %v422, %v422
    %v439 = vmul.f32 %v423, %v423
    %v440 = vmul.f32 %v424, %v424
    %v441 = vmul.f32 %v425, %v425
    %v442 = vmul.f32 %v426, %v426
    %v443 = vmul.f32 %v427, %v427
    %v444 = vmul.f32 %v428, %v428
    %v445 = vmul.f32 %v429, %v429
    %v446 = vmul.f32 %v430, %v430
    %v447 = vmul.f32 %v431, %v431
    %v449 = vsel %vm47, 1.0, 0
    %v452 = vsel %vm47, %v432, 0
    %v455 = vsel %vm47, %v433, 0
    %v458 = vsel %vm47, %v434, 0
    %v461 = vsel %vm47, %v435, 0
    %v464 = vsel %vm47, %v436, 0
    %v467 = vsel %vm47, %v437, 0
    %v470 = vsel %vm47, %v438, 0
    %v473 = vsel %vm47, %v439, 0
    %v476 = vsel %vm47, %v440, 0
    %v479 = vsel %vm47, %v441, 0
    %v482 = vsel %vm47, %v442, 0
    %v485 = vsel %vm47, %v443, 0
    %v488 = vsel %vm47, %v444, 0
    %v491 = vsel %vm47, %v445, 0
    %v494 = vsel %vm47, %v446, 0
    %v497 = vsel %vm47, %v447, 0
    %499 = vmatprep.subr.mxu0 0.0
    %v500 = vand.u32 %v497, 4294901760
    %501 = vmatpush1.xpose.msra.mxu0 %v500
    %502 = vmatprep.subr.mxu0 0.0
    %v503 = vand.u32 %v494, 4294901760
    %504 = vmatpush1.xpose.msra.mxu0 %v503
    %505 = vmatprep.subr.mxu0 0.0
    %v506 = vand.u32 %v491, 4294901760
    %507 = vmatpush1.xpose.msra.mxu0 %v506
    %508 = vmatprep.subr.mxu0 0.0
    %v509 = vand.u32 %v488, 4294901760
    %510 = vmatpush1.xpose.msra.mxu0 %v509
    %511 = vmatprep.subr.mxu0 0.0
    %v512 = vand.u32 %v485, 4294901760
    %513 = vmatpush1.xpose.msra.mxu0 %v512
    %514 = vmatprep.subr.mxu0 0.0
    %v515 = vand.u32 %v482, 4294901760
    %516 = vmatpush1.xpose.msra.mxu0 %v515
    %517 = vmatprep.subr.mxu0 0.0
    %v518 = vand.u32 %v479, 4294901760
    %519 = vmatpush1.xpose.msra.mxu0 %v518
    %520 = vmatprep.subr.mxu0 0.0
    %v521 = vand.u32 %v476, 4294901760
    %522 = vmatpush1.xpose.msra.mxu0 %v521
    %523 = vmatprep.subr.mxu0 0.0
    %v524 = vand.u32 %v473, 4294901760
    %525 = vmatpush1.xpose.msra.mxu0 %v524
    %526 = vmatprep.subr.mxu0 0.0
    %v527 = vand.u32 %v470, 4294901760
    %528 = vmatpush1.xpose.msra.mxu0 %v527
    %529 = vmatprep.subr.mxu0 0.0
    %v530 = vand.u32 %v467, 4294901760
    %531 = vmatpush1.xpose.msra.mxu0 %v530
    %532 = vmatprep.subr.mxu0 0.0
    %v533 = vand.u32 %v464, 4294901760
    %534 = vmatpush1.xpose.msra.mxu0 %v533
    %535 = vmatprep.subr.mxu0 0.0
    %v536 = vand.u32 %v461, 4294901760
    %537 = vmatpush1.xpose.msra.mxu0 %v536
    %538 = vmatprep.subr.mxu0 0.0
    %v539 = vand.u32 %v458, 4294901760
    %540 = vmatpush1.xpose.msra.mxu0 %v539
    %541 = vmatprep.subr.mxu0 0.0
    %v542 = vand.u32 %v455, 4294901760
    %543 = vmatpush1.xpose.msra.mxu0 %v542
    %544 = vmatprep.subr.mxu0 0.0
    %v545 = vand.u32 %v452, 4294901760
    %546 = vmatpush1.xpose.msra.mxu0 %v545
    %547 = vmatprep.subr.mxu0 0.0
    %548 = vmatpush2.xpose.msra.mxu0 0.0
    %549 = vmatprep.subr.mxu0 0.0
    %550 = vmatpush2.xpose.msra.mxu0 0.0
    %551 = vmatprep.subr.mxu0 0.0
    %552 = vmatpush2.xpose.msra.mxu0 0.0
    %553 = vmatprep.subr.mxu0 0.0
    %554 = vmatpush2.xpose.msra.mxu0 0.0
    %555 = vmatprep.subr.mxu0 0.0
    %556 = vmatpush2.xpose.msra.mxu0 0.0
    %557 = vmatprep.subr.mxu0 0.0
    %558 = vmatpush2.xpose.msra.mxu0 0.0
    %559 = vmatprep.subr.mxu0 0.0
    %560 = vmatpush2.xpose.msra.mxu0 0.0
    %561 = vmatprep.subr.mxu0 0.0
    %562 = vmatpush2.xpose.msra.mxu0 0.0
    %563 = vmatprep.subr.mxu0 0.0
    %564 = vmatpush2.xpose.msra.mxu0 0.0
    %565 = vmatprep.subr.mxu0 0.0
    %566 = vmatpush2.xpose.msra.mxu0 0.0
    %567 = vmatprep.subr.mxu0 0.0
    %568 = vmatpush2.xpose.msra.mxu0 0.0
    %569 = vmatprep.subr.mxu0 0.0
    %570 = vmatpush2.xpose.msra.mxu0 0.0
    %571 = vmatprep.subr.mxu0 0.0
    %572 = vmatpush2.xpose.msra.mxu0 0.0
    %573 = vmatprep.subr.mxu0 0.0
    %574 = vmatpush2.xpose.msra.mxu0 0.0
    %575 = vmatprep.subr.mxu0 0.0
    %576 = vmatpush2.xpose.msra.mxu0 0.0
    %577 = vmatprep.subr.mxu0 0.0
    %578 = vmatpush2.xpose.msra.mxu0 0.0
    %579 = vmatprep.mubr.f32.mxu0 0.0
    %v580 = vand.u32 %v449, 4294901760
    %v581 = vsub.f32 %v449, %v580
    %v582 = vand.u32 %v581, 4294901760
    %v583 = vsub.f32 %v581, %v582
    %v584 = vand.u32 %v583, 4294901760
    %585 = vmatmul.mubr.f32.gmra.mxu0 %v584
    %v586 = vpop.f32.mrf.mxu0
    %v587 = vadd.f32 0.0, %v586
    %v588 = vpop.f32.mrf.mxu0
    %589 = vdwg.mxu0
    %590 = vmatprep.subr.mxu0 0.0
    %v591 = vand.u32 %v497, 4294901760
    %v592 = vsub.f32 %v497, %v591
    %v593 = vand.u32 %v592, 4294901760
    %v594 = vsub.f32 %v592, %v593
    %v595 = vand.u32 %v594, 4294901760
    %596 = vmatpush1.xpose.msra.mxu0 %v595
    %597 = vmatprep.subr.mxu0 0.0
    %v598 = vand.u32 %v494, 4294901760
    %v599 = vsub.f32 %v494, %v598
    %v600 = vand.u32 %v599, 4294901760
    %v601 = vsub.f32 %v599, %v600
    %v602 = vand.u32 %v601, 4294901760
    %603 = vmatpush1.xpose.msra.mxu0 %v602
    %604 = vmatprep.subr.mxu0 0.0
    %v605 = vand.u32 %v491, 4294901760
    %v606 = vsub.f32 %v491, %v605
    %v607 = vand.u32 %v606, 4294901760
    %v608 = vsub.f32 %v606, %v607
    %v609 = vand.u32 %v608, 4294901760
    %610 = vmatpush1.xpose.msra.mxu0 %v609
    %611 = vmatprep.subr.mxu0 0.0
    %v612 = vand.u32 %v488, 4294901760
    %v613 = vsub.f32 %v488, %v612
    %v614 = vand.u32 %v613, 4294901760
    %v615 = vsub.f32 %v613, %v614
    %v616 = vand.u32 %v615, 4294901760
    %617 = vmatpush1.xpose.msra.mxu0 %v616
    %618 = vmatprep.subr.mxu0 0.0
    %v619 = vand.u32 %v485, 4294901760
    %v620 = vsub.f32 %v485, %v619
    %v621 = vand.u32 %v620, 4294901760
    %v622 = vsub.f32 %v620, %v621
    %v623 = vand.u32 %v622, 4294901760
    %624 = vmatpush1.xpose.msra.mxu0 %v623
    %625 = vmatprep.subr.mxu0 0.0
    %v626 = vand.u32 %v482, 4294901760
    %v627 = vsub.f32 %v482, %v626
    %v628 = vand.u32 %v627, 4294901760
    %v629 = vsub.f32 %v627, %v628
    %v630 = vand.u32 %v629, 4294901760
    %631 = vmatpush1.xpose.msra.mxu0 %v630
    %632 = vmatprep.subr.mxu0 0.0
    %v633 = vand.u32 %v479, 4294901760
    %v634 = vsub.f32 %v479, %v633
    %v635 = vand.u32 %v634, 4294901760
    %v636 = vsub.f32 %v634, %v635
    %v637 = vand.u32 %v636, 4294901760
    %638 = vmatpush1.xpose.msra.mxu0 %v637
    %639 = vmatprep.subr.mxu0 0.0
    %v640 = vand.u32 %v476, 4294901760
    %v641 = vsub.f32 %v476, %v640
    %v642 = vand.u32 %v641, 4294901760
    %v643 = vsub.f32 %v641, %v642
    %v644 = vand.u32 %v643, 4294901760
    %645 = vmatpush1.xpose.msra.mxu0 %v644
    %646 = vmatprep.subr.mxu0 0.0
    %v647 = vand.u32 %v473, 4294901760
    %v648 = vsub.f32 %v473, %v647
    %v649 = vand.u32 %v648, 4294901760
    %v650 = vsub.f32 %v648, %v649
    %v651 = vand.u32 %v650, 4294901760
    %652 = vmatpush1.xpose.msra.mxu0 %v651
    %653 = vmatprep.subr.mxu0 0.0
    %v654 = vand.u32 %v470, 4294901760
    %v655 = vsub.f32 %v470, %v654
    %v656 = vand.u32 %v655, 4294901760
    %v657 = vsub.f32 %v655, %v656
    %v658 = vand.u32 %v657, 4294901760
    %659 = vmatpush1.xpose.msra.mxu0 %v658
    %660 = vmatprep.subr.mxu0 0.0
    %v661 = vand.u32 %v467, 4294901760
    %v662 = vsub.f32 %v467, %v661
    %v663 = vand.u32 %v662, 4294901760
    %v664 = vsub.f32 %v662, %v663
    %v665 = vand.u32 %v664, 4294901760
    %666 = vmatpush1.xpose.msra.mxu0 %v665
    %667 = vmatprep.subr.mxu0 0.0
    %v668 = vand.u32 %v464, 4294901760
    %v669 = vsub.f32 %v464, %v668
    %v670 = vand.u32 %v669, 4294901760
    %v671 = vsub.f32 %v669, %v670
    %v672 = vand.u32 %v671, 4294901760
    %673 = vmatpush1.xpose.msra.mxu0 %v672
    %674 = vmatprep.subr.mxu0 0.0
    %v675 = vand.u32 %v461, 4294901760
    %v676 = vsub.f32 %v461, %v675
    %v677 = vand.u32 %v676, 4294901760
    %v678 = vsub.f32 %v676, %v677
    %v679 = vand.u32 %v678, 4294901760
    %680 = vmatpush1.xpose.msra.mxu0 %v679
    %681 = vmatprep.subr.mxu0 0.0
    %v682 = vand.u32 %v458, 4294901760
    %v683 = vsub.f32 %v458, %v682
    %v684 = vand.u32 %v683, 4294901760
    %v685 = vsub.f32 %v683, %v684
    %v686 = vand.u32 %v685, 4294901760
    %687 = vmatpush1.xpose.msra.mxu0 %v686
    %688 = vmatprep.subr.mxu0 0.0
    %v689 = vand.u32 %v455, 4294901760
    %v690 = vsub.f32 %v455, %v689
    %v691 = vand.u32 %v690, 4294901760
    %v692 = vsub.f32 %v690, %v691
    %v693 = vand.u32 %v692, 4294901760
    %694 = vmatpush1.xpose.msra.mxu0 %v693
    %695 = vmatprep.subr.mxu0 0.0
    %v696 = vand.u32 %v452, 4294901760
    %v697 = vsub.f32 %v452, %v696
    %v698 = vand.u32 %v697, 4294901760
    %v699 = vsub.f32 %v697, %v698
    %v700 = vand.u32 %v699, 4294901760
    %701 = vmatpush1.xpose.msra.mxu0 %v700
    %702 = vmatprep.subr.mxu0 0.0
    %703 = vmatpush2.xpose.msra.mxu0 0.0
    %704 = vmatprep.subr.mxu0 0.0
    %705 = vmatpush2.xpose.msra.mxu0 0.0
    %706 = vmatprep.subr.mxu0 0.0
    %707 = vmatpush2.xpose.msra.mxu0 0.0
    %708 = vmatprep.subr.mxu0 0.0
    %709 = vmatpush2.xpose.msra.mxu0 0.0
    %710 = vmatprep.subr.mxu0 0.0
    %711 = vmatpush2.xpose.msra.mxu0 0.0
    %712 = vmatprep.subr.mxu0 0.0
    %713 = vmatpush2.xpose.msra.mxu0 0.0
    %714 = vmatprep.subr.mxu0 0.0
    %715 = vmatpush2.xpose.msra.mxu0 0.0
    %716 = vmatprep.subr.mxu0 0.0
    %717 = vmatpush2.xpose.msra.mxu0 0.0
    %718 = vmatprep.subr.mxu0 0.0
    %719 = vmatpush2.xpose.msra.mxu0 0.0
    %720 = vmatprep.subr.mxu0 0.0
    %721 = vmatpush2.xpose.msra.mxu0 0.0
    %722 = vmatprep.subr.mxu0 0.0
    %723 = vmatpush2.xpose.msra.mxu0 0.0
    %724 = vmatprep.subr.mxu0 0.0
    %725 = vmatpush2.xpose.msra.mxu0 0.0
    %726 = vmatprep.subr.mxu0 0.0
    %727 = vmatpush2.xpose.msra.mxu0 0.0
    %728 = vmatprep.subr.mxu0 0.0
    %729 = vmatpush2.xpose.msra.mxu0 0.0
    %730 = vmatprep.subr.mxu0 0.0
    %731 = vmatpush2.xpose.msra.mxu0 0.0
    %732 = vmatprep.subr.mxu0 0.0
    %733 = vmatpush2.xpose.msra.mxu0 0.0
    %734 = vmatprep.mubr.f32.mxu0 0.0
    %v735 = vand.u32 %v449, 4294901760
    %736 = vmatmul.mubr.f32.gmra.mxu0 %v735
    %v737 = vpop.f32.mrf.mxu0
    %v738 = vadd.f32 %v587, %v737
    %v739 = vpop.f32.mrf.mxu0
    %740 = vdwg.mxu0
    %741 = vmatprep.subr.mxu0 0.0
    %v742 = vand.u32 %v497, 4294901760
    %v743 = vsub.f32 %v497, %v742
    %744 = vmatpush1.xpose.msra.mxu0 %v743
    %745 = vmatprep.subr.mxu0 0.0
    %v746 = vand.u32 %v494, 4294901760
    %v747 = vsub.f32 %v494, %v746
    %748 = vmatpush1.xpose.msra.mxu0 %v747
    %749 = vmatprep.subr.mxu0 0.0
    %v750 = vand.u32 %v491, 4294901760
    %v751 = vsub.f32 %v491, %v750
    %752 = vmatpush1.xpose.msra.mxu0 %v751
    %753 = vmatprep.subr.mxu0 0.0
    %v754 = vand.u32 %v488, 4294901760
    %v755 = vsub.f32 %v488, %v754
    %756 = vmatpush1.xpose.msra.mxu0 %v755
    %757 = vmatprep.subr.mxu0 0.0
    %v758 = vand.u32 %v485, 4294901760
    %v759 = vsub.f32 %v485, %v758
    %760 = vmatpush1.xpose.msra.mxu0 %v759
    %761 = vmatprep.subr.mxu0 0.0
    %v762 = vand.u32 %v482, 4294901760
    %v763 = vsub.f32 %v482, %v762
    %764 = vmatpush1.xpose.msra.mxu0 %v763
    %765 = vmatprep.subr.mxu0 0.0
    %v766 = vand.u32 %v479, 4294901760
    %v767 = vsub.f32 %v479, %v766
    %768 = vmatpush1.xpose.msra.mxu0 %v767
    %769 = vmatprep.subr.mxu0 0.0
    %v770 = vand.u32 %v476, 4294901760
    %v771 = vsub.f32 %v476, %v770
    %772 = vmatpush1.xpose.msra.mxu0 %v771
    %773 = vmatprep.subr.mxu0 0.0
    %v774 = vand.u32 %v473, 4294901760
    %v775 = vsub.f32 %v473, %v774
    %776 = vmatpush1.xpose.msra.mxu0 %v775
    %777 = vmatprep.subr.mxu0 0.0
    %v778 = vand.u32 %v470, 4294901760
    %v779 = vsub.f32 %v470, %v778
    %780 = vmatpush1.xpose.msra.mxu0 %v779
    %781 = vmatprep.subr.mxu0 0.0
    %v782 = vand.u32 %v467, 4294901760
    %v783 = vsub.f32 %v467, %v782
    %784 = vmatpush1.xpose.msra.mxu0 %v783
    %785 = vmatprep.subr.mxu0 0.0
    %v786 = vand.u32 %v464, 4294901760
    %v787 = vsub.f32 %v464, %v786
    %788 = vmatpush1.xpose.msra.mxu0 %v787
    %789 = vmatprep.subr.mxu0 0.0
    %v790 = vand.u32 %v461, 4294901760
    %v791 = vsub.f32 %v461, %v790
    %792 = vmatpush1.xpose.msra.mxu0 %v791
    %793 = vmatprep.subr.mxu0 0.0
    %v794 = vand.u32 %v458, 4294901760
    %v795 = vsub.f32 %v458, %v794
    %796 = vmatpush1.xpose.msra.mxu0 %v795
    %797 = vmatprep.subr.mxu0 0.0
    %v798 = vand.u32 %v455, 4294901760
    %v799 = vsub.f32 %v455, %v798
    %800 = vmatpush1.xpose.msra.mxu0 %v799
    %801 = vmatprep.subr.mxu0 0.0
    %v802 = vand.u32 %v452, 4294901760
    %v803 = vsub.f32 %v452, %v802
    %804 = vmatpush1.xpose.msra.mxu0 %v803
    %805 = vmatprep.subr.mxu0 0.0
    %806 = vmatpush2.xpose.msra.mxu0 0.0
    %807 = vmatprep.subr.mxu0 0.0
    %808 = vmatpush2.xpose.msra.mxu0 0.0
    %809 = vmatprep.subr.mxu0 0.0
    %810 = vmatpush2.xpose.msra.mxu0 0.0
    %811 = vmatprep.subr.mxu0 0.0
    %812 = vmatpush2.xpose.msra.mxu0 0.0
    %813 = vmatprep.subr.mxu0 0.0
    %814 = vmatpush2.xpose.msra.mxu0 0.0
    %815 = vmatprep.subr.mxu0 0.0
    %816 = vmatpush2.xpose.msra.mxu0 0.0
    %817 = vmatprep.subr.mxu0 0.0
    %818 = vmatpush2.xpose.msra.mxu0 0.0
    %819 = vmatprep.subr.mxu0 0.0
    %820 = vmatpush2.xpose.msra.mxu0 0.0
    %821 = vmatprep.subr.mxu0 0.0
    %822 = vmatpush2.xpose.msra.mxu0 0.0
    %823 = vmatprep.subr.mxu0 0.0
    %824 = vmatpush2.xpose.msra.mxu0 0.0
    %825 = vmatprep.subr.mxu0 0.0
    %826 = vmatpush2.xpose.msra.mxu0 0.0
    %827 = vmatprep.subr.mxu0 0.0
    %828 = vmatpush2.xpose.msra.mxu0 0.0
    %829 = vmatprep.subr.mxu0 0.0
    %830 = vmatpush2.xpose.msra.mxu0 0.0
    %831 = vmatprep.subr.mxu0 0.0
    %832 = vmatpush2.xpose.msra.mxu0 0.0
    %833 = vmatprep.subr.mxu0 0.0
    %834 = vmatpush2.xpose.msra.mxu0 0.0
    %835 = vmatprep.subr.mxu0 0.0
    %836 = vmatpush2.xpose.msra.mxu0 0.0
    %837 = vmatprep.mubr.f32.mxu0 0.0
    %v838 = vand.u32 %v449, 4294901760
    %v839 = vsub.f32 %v449, %v838
    %840 = vmatmul.mubr.f32.gmra.mxu0 %v839
    %v841 = vpop.f32.mrf.mxu0
    %v842 = vadd.f32 %v738, %v841
    %v843 = vpop.f32.mrf.mxu0
    %844 = vdwg.mxu0
    %845 = vmatprep.subr.mxu0 0.0
    %v846 = vand.u32 %v497, 4294901760
    %847 = vmatpush1.xpose.msra.mxu0 %v846
    %848 = vmatprep.subr.mxu0 0.0
    %v849 = vand.u32 %v494, 4294901760
    %850 = vmatpush1.xpose.msra.mxu0 %v849
    %851 = vmatprep.subr.mxu0 0.0
    %v852 = vand.u32 %v491, 4294901760
    %853 = vmatpush1.xpose.msra.mxu0 %v852
    %854 = vmatprep.subr.mxu0 0.0
    %v855 = vand.u32 %v488, 4294901760
    %856 = vmatpush1.xpose.msra.mxu0 %v855
    %857 = vmatprep.subr.mxu0 0.0
    %v858 = vand.u32 %v485, 4294901760
    %859 = vmatpush1.xpose.msra.mxu0 %v858
    %860 = vmatprep.subr.mxu0 0.0
    %v861 = vand.u32 %v482, 4294901760
    %862 = vmatpush1.xpose.msra.mxu0 %v861
    %863 = vmatprep.subr.mxu0 0.0
    %v864 = vand.u32 %v479, 4294901760
    %865 = vmatpush1.xpose.msra.mxu0 %v864
    %866 = vmatprep.subr.mxu0 0.0
    %v867 = vand.u32 %v476, 4294901760
    %868 = vmatpush1.xpose.msra.mxu0 %v867
    %869 = vmatprep.subr.mxu0 0.0
    %v870 = vand.u32 %v473, 4294901760
    %871 = vmatpush1.xpose.msra.mxu0 %v870
    %872 = vmatprep.subr.mxu0 0.0
    %v873 = vand.u32 %v470, 4294901760
    %874 = vmatpush1.xpose.msra.mxu0 %v873
    %875 = vmatprep.subr.mxu0 0.0
    %v876 = vand.u32 %v467, 4294901760
    %877 = vmatpush1.xpose.msra.mxu0 %v876
    %878 = vmatprep.subr.mxu0 0.0
    %v879 = vand.u32 %v464, 4294901760
    %880 = vmatpush1.xpose.msra.mxu0 %v879
    %881 = vmatprep.subr.mxu0 0.0
    %v882 = vand.u32 %v461, 4294901760
    %883 = vmatpush1.xpose.msra.mxu0 %v882
    %884 = vmatprep.subr.mxu0 0.0
    %v885 = vand.u32 %v458, 4294901760
    %886 = vmatpush1.xpose.msra.mxu0 %v885
    %887 = vmatprep.subr.mxu0 0.0
    %v888 = vand.u32 %v455, 4294901760
    %889 = vmatpush1.xpose.msra.mxu0 %v888
    %890 = vmatprep.subr.mxu0 0.0
    %v891 = vand.u32 %v452, 4294901760
    %892 = vmatpush1.xpose.msra.mxu0 %v891
    %893 = vmatprep.subr.mxu0 0.0
    %894 = vmatpush2.xpose.msra.mxu0 0.0
    %895 = vmatprep.subr.mxu0 0.0
    %896 = vmatpush2.xpose.msra.mxu0 0.0
    %897 = vmatprep.subr.mxu0 0.0
    %898 = vmatpush2.xpose.msra.mxu0 0.0
    %899 = vmatprep.subr.mxu0 0.0
    %900 = vmatpush2.xpose.msra.mxu0 0.0
    %901 = vmatprep.subr.mxu0 0.0
    %902 = vmatpush2.xpose.msra.mxu0 0.0
    %903 = vmatprep.subr.mxu0 0.0
    %904 = vmatpush2.xpose.msra.mxu0 0.0
    %905 = vmatprep.subr.mxu0 0.0
    %906 = vmatpush2.xpose.msra.mxu0 0.0
    %907 = vmatprep.subr.mxu0 0.0
    %908 = vmatpush2.xpose.msra.mxu0 0.0
    %909 = vmatprep.subr.mxu0 0.0
    %910 = vmatpush2.xpose.msra.mxu0 0.0
    %911 = vmatprep.subr.mxu0 0.0
    %912 = vmatpush2.xpose.msra.mxu0 0.0
    %913 = vmatprep.subr.mxu0 0.0
    %914 = vmatpush2.xpose.msra.mxu0 0.0
    %915 = vmatprep.subr.mxu0 0.0
    %916 = vmatpush2.xpose.msra.mxu0 0.0
    %917 = vmatprep.subr.mxu0 0.0
    %918 = vmatpush2.xpose.msra.mxu0 0.0
    %919 = vmatprep.subr.mxu0 0.0
    %920 = vmatpush2.xpose.msra.mxu0 0.0
    %921 = vmatprep.subr.mxu0 0.0
    %922 = vmatpush2.xpose.msra.mxu0 0.0
    %923 = vmatprep.subr.mxu0 0.0
    %924 = vmatpush2.xpose.msra.mxu0 0.0
    %925 = vmatprep.mubr.f32.mxu0 0.0
    %v926 = vand.u32 %v449, 4294901760
    %v927 = vsub.f32 %v449, %v926
    %v928 = vand.u32 %v927, 4294901760
    %929 = vmatmul.mubr.f32.gmra.mxu0 %v928
    %v930 = vpop.f32.mrf.mxu0
    %v931 = vadd.f32 %v842, %v930
    %v932 = vpop.f32.mrf.mxu0
    %933 = vdwg.mxu0
    %934 = vmatprep.subr.mxu0 0.0
    %v935 = vand.u32 %v497, 4294901760
    %v936 = vsub.f32 %v497, %v935
    %v937 = vand.u32 %v936, 4294901760
    %938 = vmatpush1.xpose.msra.mxu0 %v937
    %939 = vmatprep.subr.mxu0 0.0
    %v940 = vand.u32 %v494, 4294901760
    %v941 = vsub.f32 %v494, %v940
    %v942 = vand.u32 %v941, 4294901760
    %943 = vmatpush1.xpose.msra.mxu0 %v942
    %944 = vmatprep.subr.mxu0 0.0
    %v945 = vand.u32 %v491, 4294901760
    %v946 = vsub.f32 %v491, %v945
    %v947 = vand.u32 %v946, 4294901760
    %948 = vmatpush1.xpose.msra.mxu0 %v947
    %949 = vmatprep.subr.mxu0 0.0
    %v950 = vand.u32 %v488, 4294901760
    %v951 = vsub.f32 %v488, %v950
    %v952 = vand.u32 %v951, 4294901760
    %953 = vmatpush1.xpose.msra.mxu0 %v952
    %954 = vmatprep.subr.mxu0 0.0
    %v955 = vand.u32 %v485, 4294901760
    %v956 = vsub.f32 %v485, %v955
    %v957 = vand.u32 %v956, 4294901760
    %958 = vmatpush1.xpose.msra.mxu0 %v957
    %959 = vmatprep.subr.mxu0 0.0
    %v960 = vand.u32 %v482, 4294901760
    %v961 = vsub.f32 %v482, %v960
    %v962 = vand.u32 %v961, 4294901760
    %963 = vmatpush1.xpose.msra.mxu0 %v962
    %964 = vmatprep.subr.mxu0 0.0
    %v965 = vand.u32 %v479, 4294901760
    %v966 = vsub.f32 %v479, %v965
    %v967 = vand.u32 %v966, 4294901760
    %968 = vmatpush1.xpose.msra.mxu0 %v967
    %969 = vmatprep.subr.mxu0 0.0
    %v970 = vand.u32 %v476, 4294901760
    %v971 = vsub.f32 %v476, %v970
    %v972 = vand.u32 %v971, 4294901760
    %973 = vmatpush1.xpose.msra.mxu0 %v972
    %974 = vmatprep.subr.mxu0 0.0
    %v975 = vand.u32 %v473, 4294901760
    %v976 = vsub.f32 %v473, %v975
    %v977 = vand.u32 %v976, 4294901760
    %978 = vmatpush1.xpose.msra.mxu0 %v977
    %979 = vmatprep.subr.mxu0 0.0
    %v980 = vand.u32 %v470, 4294901760
    %v981 = vsub.f32 %v470, %v980
    %v982 = vand.u32 %v981, 4294901760
    %983 = vmatpush1.xpose.msra.mxu0 %v982
    %984 = vmatprep.subr.mxu0 0.0
    %v985 = vand.u32 %v467, 4294901760
    %v986 = vsub.f32 %v467, %v985
    %v987 = vand.u32 %v986, 4294901760
    %988 = vmatpush1.xpose.msra.mxu0 %v987
    %989 = vmatprep.subr.mxu0 0.0
    %v990 = vand.u32 %v464, 4294901760
    %v991 = vsub.f32 %v464, %v990
    %v992 = vand.u32 %v991, 4294901760
    %993 = vmatpush1.xpose.msra.mxu0 %v992
    %994 = vmatprep.subr.mxu0 0.0
    %v995 = vand.u32 %v461, 4294901760
    %v996 = vsub.f32 %v461, %v995
    %v997 = vand.u32 %v996, 4294901760
    %998 = vmatpush1.xpose.msra.mxu0 %v997
    %999 = vmatprep.subr.mxu0 0.0
    %v1000 = vand.u32 %v458, 4294901760
    %v1001 = vsub.f32 %v458, %v1000
    %v1002 = vand.u32 %v1001, 4294901760
    %1003 = vmatpush1.xpose.msra.mxu0 %v1002
    %1004 = vmatprep.subr.mxu0 0.0
    %v1005 = vand.u32 %v455, 4294901760
    %v1006 = vsub.f32 %v455, %v1005
    %v1007 = vand.u32 %v1006, 4294901760
    %1008 = vmatpush1.xpose.msra.mxu0 %v1007
    %1009 = vmatprep.subr.mxu0 0.0
    %v1010 = vand.u32 %v452, 4294901760
    %v1011 = vsub.f32 %v452, %v1010
    %v1012 = vand.u32 %v1011, 4294901760
    %1013 = vmatpush1.xpose.msra.mxu0 %v1012
    %1014 = vmatprep.subr.mxu0 0.0
    %1015 = vmatpush2.xpose.msra.mxu0 0.0
    %1016 = vmatprep.subr.mxu0 0.0
    %1017 = vmatpush2.xpose.msra.mxu0 0.0
    %1018 = vmatprep.subr.mxu0 0.0
    %1019 = vmatpush2.xpose.msra.mxu0 0.0
    %1020 = vmatprep.subr.mxu0 0.0
    %1021 = vmatpush2.xpose.msra.mxu0 0.0
    %1022 = vmatprep.subr.mxu0 0.0
    %1023 = vmatpush2.xpose.msra.mxu0 0.0
    %1024 = vmatprep.subr.mxu0 0.0
    %1025 = vmatpush2.xpose.msra.mxu0 0.0
    %1026 = vmatprep.subr.mxu0 0.0
    %1027 = vmatpush2.xpose.msra.mxu0 0.0
    %1028 = vmatprep.subr.mxu0 0.0
    %1029 = vmatpush2.xpose.msra.mxu0 0.0
    %1030 = vmatprep.subr.mxu0 0.0
    %1031 = vmatpush2.xpose.msra.mxu0 0.0
    %1032 = vmatprep.subr.mxu0 0.0
    %1033 = vmatpush2.xpose.msra.mxu0 0.0
    %1034 = vmatprep.subr.mxu0 0.0
    %1035 = vmatpush2.xpose.msra.mxu0 0.0
    %1036 = vmatprep.subr.mxu0 0.0
    %1037 = vmatpush2.xpose.msra.mxu0 0.0
    %1038 = vmatprep.subr.mxu0 0.0
    %1039 = vmatpush2.xpose.msra.mxu0 0.0
    %1040 = vmatprep.subr.mxu0 0.0
    %1041 = vmatpush2.xpose.msra.mxu0 0.0
    %1042 = vmatprep.subr.mxu0 0.0
    %1043 = vmatpush2.xpose.msra.mxu0 0.0
    %1044 = vmatprep.subr.mxu0 0.0
    %1045 = vmatpush2.xpose.msra.mxu0 0.0
    %1046 = vmatprep.mubr.f32.mxu0 0.0
    %v1047 = vand.u32 %v449, 4294901760
    %1048 = vmatmul.mubr.f32.gmra.mxu0 %v1047
    %v1049 = vpop.f32.mrf.mxu0
    %v1050 = vadd.f32 %v931, %v1049
    %v1051 = vpop.f32.mrf.mxu0
    %1052 = vdwg.mxu0
    %1053 = vmatprep.subr.mxu0 0.0
    %v1054 = vand.u32 %v497, 4294901760
    %1055 = vmatpush1.xpose.msra.mxu0 %v1054
    %1056 = vmatprep.subr.mxu0 0.0
    %v1057 = vand.u32 %v494, 4294901760
    %1058 = vmatpush1.xpose.msra.mxu0 %v1057
    %1059 = vmatprep.subr.mxu0 0.0
    %v1060 = vand.u32 %v491, 4294901760
    %1061 = vmatpush1.xpose.msra.mxu0 %v1060
    %1062 = vmatprep.subr.mxu0 0.0
    %v1063 = vand.u32 %v488, 4294901760
    %1064 = vmatpush1.xpose.msra.mxu0 %v1063
    %1065 = vmatprep.subr.mxu0 0.0
    %v1066 = vand.u32 %v485, 4294901760
    %1067 = vmatpush1.xpose.msra.mxu0 %v1066
    %1068 = vmatprep.subr.mxu0 0.0
    %v1069 = vand.u32 %v482, 4294901760
    %1070 = vmatpush1.xpose.msra.mxu0 %v1069
    %1071 = vmatprep.subr.mxu0 0.0
    %v1072 = vand.u32 %v479, 4294901760
    %1073 = vmatpush1.xpose.msra.mxu0 %v1072
    %1074 = vmatprep.subr.mxu0 0.0
    %v1075 = vand.u32 %v476, 4294901760
    %1076 = vmatpush1.xpose.msra.mxu0 %v1075
    %1077 = vmatprep.subr.mxu0 0.0
    %v1078 = vand.u32 %v473, 4294901760
    %1079 = vmatpush1.xpose.msra.mxu0 %v1078
    %1080 = vmatprep.subr.mxu0 0.0
    %v1081 = vand.u32 %v470, 4294901760
    %1082 = vmatpush1.xpose.msra.mxu0 %v1081
    %1083 = vmatprep.subr.mxu0 0.0
    %v1084 = vand.u32 %v467, 4294901760
    %1085 = vmatpush1.xpose.msra.mxu0 %v1084
    %1086 = vmatprep.subr.mxu0 0.0
    %v1087 = vand.u32 %v464, 4294901760
    %1088 = vmatpush1.xpose.msra.mxu0 %v1087
    %1089 = vmatprep.subr.mxu0 0.0
    %v1090 = vand.u32 %v461, 4294901760
    %1091 = vmatpush1.xpose.msra.mxu0 %v1090
    %1092 = vmatprep.subr.mxu0 0.0
    %v1093 = vand.u32 %v458, 4294901760
    %1094 = vmatpush1.xpose.msra.mxu0 %v1093
    %1095 = vmatprep.subr.mxu0 0.0
    %v1096 = vand.u32 %v455, 4294901760
    %1097 = vmatpush1.xpose.msra.mxu0 %v1096
    %1098 = vmatprep.subr.mxu0 0.0
    %v1099 = vand.u32 %v452, 4294901760
    %1100 = vmatpush1.xpose.msra.mxu0 %v1099
    %1101 = vmatprep.subr.mxu0 0.0
    %1102 = vmatpush2.xpose.msra.mxu0 0.0
    %1103 = vmatprep.subr.mxu0 0.0
    %1104 = vmatpush2.xpose.msra.mxu0 0.0
    %1105 = vmatprep.subr.mxu0 0.0
    %1106 = vmatpush2.xpose.msra.mxu0 0.0
    %1107 = vmatprep.subr.mxu0 0.0
    %1108 = vmatpush2.xpose.msra.mxu0 0.0
    %1109 = vmatprep.subr.mxu0 0.0
    %1110 = vmatpush2.xpose.msra.mxu0 0.0
    %1111 = vmatprep.subr.mxu0 0.0
    %1112 = vmatpush2.xpose.msra.mxu0 0.0
    %1113 = vmatprep.subr.mxu0 0.0
    %1114 = vmatpush2.xpose.msra.mxu0 0.0
    %1115 = vmatprep.subr.mxu0 0.0
    %1116 = vmatpush2.xpose.msra.mxu0 0.0
    %1117 = vmatprep.subr.mxu0 0.0
    %1118 = vmatpush2.xpose.msra.mxu0 0.0
    %1119 = vmatprep.subr.mxu0 0.0
    %1120 = vmatpush2.xpose.msra.mxu0 0.0
    %1121 = vmatprep.subr.mxu0 0.0
    %1122 = vmatpush2.xpose.msra.mxu0 0.0
    %1123 = vmatprep.subr.mxu0 0.0
    %1124 = vmatpush2.xpose.msra.mxu0 0.0
    %1125 = vmatprep.subr.mxu0 0.0
    %1126 = vmatpush2.xpose.msra.mxu0 0.0
    %1127 = vmatprep.subr.mxu0 0.0
    %1128 = vmatpush2.xpose.msra.mxu0 0.0
    %1129 = vmatprep.subr.mxu0 0.0
    %1130 = vmatpush2.xpose.msra.mxu0 0.0
    %1131 = vmatprep.subr.mxu0 0.0
    %1132 = vmatpush2.xpose.msra.mxu0 0.0
    %1133 = vmatprep.mubr.f32.mxu0 0.0
    %v1134 = vand.u32 %v449, 4294901760
    %1135 = vmatmul.mubr.f32.gmra.mxu0 %v1134
    %v1136 = vpop.f32.mrf.mxu0
    %v1137 = vadd.f32 %v1050, %v1136
    %v1138 = vpop.f32.mrf.mxu0
    %1139 = vdwg.mxu0
    %v1140 = vrsqrt.pop %v1137
    %v1141 = vmul.f32 %v1137, %v1140
    %vm1142 = vcmp.eq.f32.partialorder %v1137, inf
    %v1143 = vsel %vm1142, %v1137, %v1141
    %vm1144 = vcmp.eq.f32.partialorder %v1137, 0.0
    %v1145 = vand.u32 %v1137, 2147483648
    %v1146 = vsel %vm1144, %v1145, %v1143
    %1147 = vst [vmem:[#allocation2] sm:$0x1] %v1146
    // Predicated region
    $region14: #{tpu_custom_call.1} parent=1 // pred_check
      _
    $region15: #{tpu_custom_call.1} parent=1 // pred_check_branch
      %1149 = sbr.rel (0) target = $region17
    $region16: #{tpu_custom_call.1} parent=1 // pred_region
      %s1151 = ssub.s32 16, 16
      %1152 = vsyncadd [#allocation3], %s1151
      %s1154 = sshll.u32 [#allocation2], 4
      %s1155 = int_to_ptr.vmem [resolvable:$true] %s1154
      %1157 = dma.vmem_to_hbm [thread:$0]  %s1155, 16, %s3, [#allocation3]
    $region17: #{tpu_custom_call.1} parent=1 // pred_fallthru
      _
    // Predicated region
    $region18: #{tpu_custom_call.1} parent=1 // pred_check
      _
    $region19: #{tpu_custom_call.1} parent=1 // pred_check_branch
      %1159 = sbr.rel (0) target = $region21
    $region20: #{tpu_custom_call.1} parent=1 // pred_region
      %1160 = dma.done [#allocation3], 16
    $region21: #{tpu_custom_call.1} parent=1 // pred_fallthru
      _
    %1161 = vsyncpa [#allocation3], 1

</llo_original>
